<compile_context>
chip_gen: v7x
topology: tpu7x:2x2x1
jax: 0.10.0
libtpu: 0.0.40
codegen_flags: <defaults>
</compile_context>

<pallas_src>
import functools
import math

import jax
import jax.numpy as jnp
from jax import lax
from jax.experimental import pallas as pl
from jax.experimental.pallas import tpu as pltpu

LANE = 128
ROW_ALIGN = 16                 # block rows multiple: legal for f32 (8) and bf16 (16)
HARD_MAX_BLOCK_ROWS = 8192     # (8192,128) f32 block = 4 MiB per stream per buffer


def _round_up(x, m):
    return ((x + m - 1) // m) * m


def _vmem_budget_bytes():
    """Conservative budget for the double-buffered pipelined streams."""
    try:
        cap = int(pltpu.get_tpu_info().vmem_capacity_bytes)
    except Exception:
        cap = 64 << 20         # assume the smallest generation (v7x: 64 MiB / TC)
    return max(8 << 20, min(cap // 4, 32 << 20))


def _pick_block_rows(rows, stream_itemsizes, budget_bytes, max_block_rows):
    per_row = 2 * LANE * sum(stream_itemsizes)       # x2 for double buffering
    br = budget_bytes // per_row
    br = min(br, max_block_rows, _round_up(rows, ROW_ALIGN))
    br = max(ROW_ALIGN, (br // ROW_ALIGN) * ROW_ALIGN)
    return int(br)


def _elementwise_loss(pred_f32, tgt_f32, *, alpha, gamma, beta, b):
    # (alpha/b)*(b*d+1)*log1p(b*d/beta) - alpha*d
    #   == (alpha*d + alpha/b)*log1p(d*(b/beta)) - alpha*d
    alpha_over_b = alpha / b
    b_over_beta = b / beta
    big_const = gamma / b - alpha * beta
    diff = jnp.abs(pred_f32 - tgt_f32)
    ad = alpha * diff
    small = (ad + alpha_over_b) * jnp.log1p(diff * b_over_beta) - ad
    big = gamma * diff + big_const
    return jnp.where(diff < beta, small, big)


# ---------------------------------------------------------------------------
# Kernels
# ---------------------------------------------------------------------------

def _reduce_kernel(*refs, alpha, gamma, beta, b, has_weight, rows, block_rows,
                   need_mask):
    """Grid (steps,): each step writes an independent (8, LANE) partial sum."""
    if has_weight:
        pred_ref, tgt_ref, w_ref, out_ref = refs
    else:
        pred_ref, tgt_ref, out_ref = refs
        w_ref = None

    loss = _elementwise_loss(pred_ref[...].astype(jnp.float32),
                             tgt_ref[...].astype(jnp.float32),
                             alpha=alpha, gamma=gamma, beta=beta, b=b)
    if w_ref is not None:
        loss = loss * w_ref[...].astype(jnp.float32)

    if need_mask:
        # Last block may overhang the (rows, LANE) slab; zero the garbage rows.
        row_ids = (lax.broadcasted_iota(jnp.int32, (block_rows, LANE), 0)
                   + pl.program_id(0) * block_rows)
        loss = jnp.where(row_ids < rows, loss, 0.0)

    # Sublane-aligned partial sum: pure VALU vreg adds, no XLU, no scratch RMW.
    out_ref[0] = loss.reshape(block_rows // 8, 8, LANE).sum(axis=0)


def _none_kernel(*refs, alpha, gamma, beta, b, has_weight):
    """Grid (steps,): elementwise loss writeback only."""
    if has_weight:
        pred_ref, tgt_ref, w_ref, out_ref = refs
    else:
        pred_ref, tgt_ref, out_ref = refs
        w_ref = None

    loss = _elementwise_loss(pred_ref[...].astype(jnp.float32),
                             tgt_ref[...].astype(jnp.float32),
                             alpha=alpha, gamma=gamma, beta=beta, b=b)
    if w_ref is not None:
        loss = loss * w_ref[...].astype(jnp.float32)
    out_ref[...] = loss.astype(out_ref.dtype)


# ---------------------------------------------------------------------------
# pallas_call wrappers
# ---------------------------------------------------------------------------

def _run_reduce(slabs, rows, block_rows, steps, alpha, gamma, beta, vmem_limit):
    has_weight = len(slabs) == 3
    b = math.exp(gamma / alpha) - 1.0
    kern = functools.partial(
        _reduce_kernel, alpha=float(alpha), gamma=float(gamma),
        beta=float(beta), b=float(b), has_weight=has_weight,
        rows=int(rows), block_rows=int(block_rows),
        need_mask=(rows % block_rows != 0))
    blk = pl.BlockSpec((block_rows, LANE), lambda i: (i, 0))
    partials = pl.pallas_call(
        kern,
        out_shape=jax.ShapeDtypeStruct((steps, 8, LANE), jnp.float32),
        grid=(steps,),
        in_specs=[blk] * len(slabs),
        out_specs=pl.BlockSpec((1, 8, LANE), lambda i: (i, 0, 0)),
        compiler_params=pltpu.CompilerParams(
            dimension_semantics=("parallel",),
            vmem_limit_bytes=vmem_limit),
    )(*slabs)
    return jnp.sum(partials)


def _run_none(slabs, rows, block_rows, steps, alpha, gamma, beta, out_dtype,
              vmem_limit):
    has_weight = len(slabs) == 3
    b = math.exp(gamma / alpha) - 1.0
    kern = functools.partial(
        _none_kernel, alpha=float(alpha), gamma=float(gamma),
        beta=float(beta), b=float(b), has_weight=has_weight)
    blk = pl.BlockSpec((block_rows, LANE), lambda i: (i, 0))
    return pl.pallas_call(
        kern,
        out_shape=jax.ShapeDtypeStruct((rows, LANE), out_dtype),
        grid=(steps,),
        in_specs=[blk] * len(slabs),
        out_specs=blk,
        compiler_params=pltpu.CompilerParams(
            dimension_semantics=("parallel",),
            vmem_limit_bytes=vmem_limit),
    )(*slabs)


# ---------------------------------------------------------------------------
# Public API
# ---------------------------------------------------------------------------

def _prep_dtype(x):
    x = jnp.asarray(x)
    if x.dtype not in (jnp.float32, jnp.bfloat16):
        x = x.astype(jnp.float32)
    return x


def _to_slab(x, rows):
    flat = jnp.ravel(x)
    pad = rows * LANE - flat.shape[0]
    if pad:
        flat = jnp.pad(flat, (0, pad))   # <=127 elements; keeps tail loss == 0
    return flat.reshape(rows, LANE)


def balanced_l1_loss_pallas(pred, target, weight=None, *, alpha=0.5, gamma=1.5,
                            beta=1.0, reduction='mean', avg_factor=None,
                            loss_weight=1.0, max_block_rows=None):
    """Forward of BalancedL1Loss (elementwise loss, weight, reduction)."""
    assert beta > 0
    pred = jnp.asarray(pred)
    target = jnp.asarray(target)
    assert pred.shape == target.shape and pred.size > 0
    assert reduction in ('none', 'mean', 'sum')
    if avg_factor is not None and reduction == 'sum':
        raise ValueError('avg_factor can not be used with reduction="sum"')

    orig_shape = pred.shape
    n = int(pred.size)

    pred = _prep_dtype(pred)
    target = _prep_dtype(target)
    out_dtype = jnp.result_type(pred.dtype, target.dtype)

    scalar_weight = None
    w_elem = None
    if weight is not None:
        weight = _prep_dtype(weight)
        if int(weight.size) == 1:
            # Scalar weight commutes with the reduction: no third HBM stream.
            scalar_weight = jnp.reshape(weight, ()).astype(jnp.float32)
        else:
            w_elem = jnp.broadcast_to(weight, orig_shape)
            out_dtype = jnp.result_type(out_dtype, weight.dtype)

    rows = -(-n // LANE)
    streams = [pred, target] + ([w_elem] if w_elem is not None else [])
    itemsizes = [jnp.dtype(s.dtype).itemsize for s in streams]
    if reduction == 'none':
        itemsizes.append(jnp.dtype(out_dtype).itemsize)

    budget = _vmem_budget_bytes()
    if max_block_rows is None:
        max_block_rows = HARD_MAX_BLOCK_ROWS
    block_rows = _pick_block_rows(rows, itemsizes, budget, max_block_rows)
    steps = -(-rows // block_rows)
    vmem_limit = int(min(2 * budget, 64 << 20))

    slabs = [_to_slab(s, rows) for s in streams]

    if reduction == 'none':
        loss2d = _run_none(slabs, rows, block_rows, steps, alpha, gamma, beta,
                           out_dtype, vmem_limit)
        out = loss2d.reshape(-1)[:n].reshape(orig_shape)
        if scalar_weight is not None:
            out = (out * scalar_weight).astype(out_dtype)
    else:
        total = _run_reduce(slabs, rows, block_rows, steps, alpha, gamma, beta,
                            vmem_limit)
        if scalar_weight is not None:
            total = total * scalar_weight
        if avg_factor is not None:
            out = total / jnp.float32(avg_factor)
        elif reduction == 'mean':
            out = total / jnp.float32(n)
        else:  # 'sum'
            out = total

    return loss_weight * out


class BalancedL1Loss:
    """JAX/Pallas port of the PyTorch BalancedL1Loss module (forward only)."""

    def __init__(self, alpha=0.5, gamma=1.5, beta=1.0, reduction='mean',
                 loss_weight=1.0):
        self.alpha = alpha
        self.gamma = gamma
        self.beta = beta
        self.reduction = reduction
        self.loss_weight = loss_weight

    def __call__(self, y_pred, y_true, weight=None, avg_factor=None,
                 reduction_override=None, **kwargs):
        assert reduction_override in (None, 'none', 'mean', 'sum')
        reduction = reduction_override if reduction_override else self.reduction
        return balanced_l1_loss_pallas(
            y_pred, y_true, weight,
            alpha=self.alpha, gamma=self.gamma, beta=self.beta,
            reduction=reduction, avg_factor=avg_factor,
            loss_weight=self.loss_weight, **kwargs)


# ---------------------------------------------------------------------------
# Reference + self-test
# ---------------------------------------------------------------------------

def _reference(pred, target, weight, reduction, avg_factor,
               alpha, gamma, beta, loss_weight):
    pred = jnp.asarray(pred, jnp.float32)
    target = jnp.asarray(target, jnp.float32)
    diff = jnp.abs(pred - target)
    b = math.exp(gamma / alpha) - 1.0
    loss = jnp.where(diff < beta,
                     alpha / b * (b * diff + 1) * jnp.log(b * diff / beta + 1)
                     - alpha * diff,
                     gamma * diff + gamma / b - alpha * beta)
    if weight is not None:
        loss = loss * jnp.asarray(weight, jnp.float32)
    if avg_factor is None:
        if reduction == 'mean':
            loss = loss.mean()
        elif reduction == 'sum':
            loss = loss.sum()
    elif reduction == 'mean':
        loss = loss.sum() / avg_factor
    return loss_weight * loss


def _close(a, b, rtol=2e-3):
    a = jnp.asarray(a, jnp.float32)
    b = jnp.asarray(b, jnp.float32)
    scale = max(1.0, float(jnp.max(jnp.abs(b))))
    return float(jnp.max(jnp.abs(a - b))) <= rtol * scale


if __name__ == "__main__":
    key = jax.random.PRNGKey(0)
    k1, k2, k3, k4, k5, k6, k7 = jax.random.split(key, 7)

    loss_mod = BalancedL1Loss(alpha=0.5, gamma=1.5, beta=1.0,
                              reduction='mean', loss_weight=1.0)

    # Typical bbox-regression shape: (num_boxes, 4)
    pred = jax.random.normal(k1, (256, 4), jnp.float32) * 2.0
    target = jax.random.normal(k2, (256, 4), jnp.float32) * 2.0
    weight = (jax.random.uniform(k3, (256, 4)) > 0.3).astype(jnp.float32)

    # mean reduction (default), no weight
    out_mean = jax.block_until_ready(loss_mod(pred, target))
    ref_mean = _reference(pred, target, None, 'mean', None, 0.5, 1.5, 1.0, 1.0)
    assert _close(out_mean, ref_mean), (out_mean, ref_mean)

    # elementwise weight + avg_factor
    out_avg = jax.block_until_ready(
        loss_mod(pred, target, weight=weight, avg_factor=100.0))
    ref_avg = _reference(pred, target, weight, 'mean', 100.0, 0.5, 1.5, 1.0, 1.0)
    assert _close(out_avg, ref_avg), (out_avg, ref_avg)

    # scalar weight (applied outside the kernel, no third stream)
    out_sw = jax.block_until_ready(
        loss_mod(pred, target, weight=jnp.asarray(2.0, jnp.float32)))
    ref_sw = _reference(pred, target, 2.0, 'mean', None, 0.5, 1.5, 1.0, 1.0)
    assert _close(out_sw, ref_sw), (out_sw, ref_sw)

    # reduction='none' -> elementwise kernel
    out_none = jax.block_until_ready(
        loss_mod(pred, target, reduction_override='none'))
    ref_none = _reference(pred, target, None, 'none', None, 0.5, 1.5, 1.0, 1.0)
    assert out_none.shape == pred.shape
    assert _close(out_none, ref_none)

    # bf16 inputs, sum reduction (native-dtype streaming, f32 accumulation)
    pred_b = (jax.random.normal(k4, (8, 4, 32, 32), jnp.float32) * 2.0
              ).astype(jnp.bfloat16)
    targ_b = (jax.random.normal(k5, (8, 4, 32, 32), jnp.float32) * 2.0
              ).astype(jnp.bfloat16)
    out_sum = jax.block_until_ready(
        loss_mod(pred_b, targ_b, reduction_override='sum'))
    ref_sum = _reference(pred_b.astype(jnp.float32), targ_b.astype(jnp.float32),
                         None, 'sum', None, 0.5, 1.5, 1.0, 1.0)
    assert _close(out_sum, ref_sum), (out_sum, ref_sum)
    # bf16 'none' output preserves dtype
    out_none_b = jax.block_until_ready(
        loss_mod(pred_b, targ_b, reduction_override='none'))
    assert out_none_b.dtype == jnp.bfloat16 and out_none_b.shape == pred_b.shape

    # ragged size + forced multi-step grid: exercises the in-kernel row mask
    pred_r = jax.random.normal(k6, (1000, 7), jnp.float32) * 2.0
    targ_r = jax.random.normal(k7, (1000, 7), jnp.float32) * 2.0
    out_rm = jax.block_until_ready(
        loss_mod(pred_r, targ_r, max_block_rows=16))
    ref_rm = _reference(pred_r, targ_r, None, 'mean', None, 0.5, 1.5, 1.0, 1.0)
    assert _close(out_rm, ref_rm), (out_rm, ref_rm)
    out_rn = jax.block_until_ready(
        loss_mod(pred_r, targ_r, reduction_override='none', max_block_rows=16))
    ref_rn = _reference(pred_r, targ_r, None, 'none', None, 0.5, 1.5, 1.0, 1.0)
    assert _close(out_rn, ref_rn)

    print("KERNEL_OK")
</pallas_src>

<mosaic_0001>
module attributes {stable_mosaic.version = 11 : i64} {
  func.func @_reduce_kernel(%arg0: i32, %arg1: memref<16x128xf32, #tpu.memory_space<vmem>>, %arg2: memref<16x128xf32, #tpu.memory_space<vmem>>, %arg3: memref<1x8x128xf32, #tpu.memory_space<vmem>>) attributes {dimension_semantics = [#tpu.dimension_semantics<parallel>], iteration_bounds = array<i64: 1>, scalar_prefetch = 0 : i64, scratch_operands = 0 : i64, tpu.core_type = #tpu.core_type<tc>, window_params = [{transform_indices = @transform_0, window_bounds = array<i64: 16, 128>}, {transform_indices = @transform_1, window_bounds = array<i64: 16, 128>}, {transform_indices = @transform_2, window_bounds = array<i64: 1, 8, 128>}]} {
    %c0 = arith.constant 0 : index
    %c0_0 = arith.constant 0 : index
    %0 = vector.load %arg1[%c0, %c0_0] : memref<16x128xf32, #tpu.memory_space<vmem>>, vector<16x128xf32>
    %c0_1 = arith.constant 0 : index
    %c0_2 = arith.constant 0 : index
    %1 = vector.load %arg2[%c0_1, %c0_2] : memref<16x128xf32, #tpu.memory_space<vmem>>, vector<16x128xf32>
    %2 = arith.subf %0, %1 : vector<16x128xf32>
    %3 = math.absf %2 : vector<16x128xf32>
    %cst = arith.constant 5.000000e-01 : f32
    %4 = vector.broadcast %cst : f32 to vector<16x128xf32>
    %5 = arith.mulf %4, %3 : vector<16x128xf32>
    %cst_3 = arith.constant 0.0261978488 : f32
    %6 = vector.broadcast %cst_3 : f32 to vector<16x128xf32>
    %7 = arith.addf %5, %6 : vector<16x128xf32>
    %cst_4 = arith.constant 19.085537 : f32
    %8 = vector.broadcast %cst_4 : f32 to vector<16x128xf32>
    %9 = arith.mulf %3, %8 : vector<16x128xf32>
    %10 = math.log1p %9 : vector<16x128xf32>
    %11 = arith.mulf %7, %10 : vector<16x128xf32>
    %12 = arith.subf %11, %5 : vector<16x128xf32>
    %cst_5 = arith.constant 1.500000e+00 : f32
    %13 = vector.broadcast %cst_5 : f32 to vector<16x128xf32>
    %14 = arith.mulf %13, %3 : vector<16x128xf32>
    %cst_6 = arith.constant -0.421406448 : f32
    %15 = vector.broadcast %cst_6 : f32 to vector<16x128xf32>
    %16 = arith.addf %14, %15 : vector<16x128xf32>
    %cst_7 = arith.constant 1.000000e+00 : f32
    %17 = vector.broadcast %cst_7 : f32 to vector<16x128xf32>
    %18 = arith.cmpf olt, %3, %17 : vector<16x128xf32>
    %19 = arith.select %18, %12, %16 : vector<16x128xi1>, vector<16x128xf32>
    %20 = tpu.iota {dimensions = array<i32: 0>} : vector<16x128xi32>
    %c16_i32 = arith.constant 16 : i32
    %21 = arith.muli %arg0, %c16_i32 : i32
    %22 = vector.broadcast %21 : i32 to vector<16x128xi32>
    %23 = arith.addi %20, %22 : vector<16x128xi32>
    %c8_i32 = arith.constant 8 : i32
    %24 = vector.broadcast %c8_i32 : i32 to vector<16x128xi32>
    %25 = arith.cmpi slt, %23, %24 : vector<16x128xi32>
    %cst_8 = arith.constant 0.000000e+00 : f32
    %26 = vector.broadcast %cst_8 : f32 to vector<16x128xf32>
    %27 = arith.select %25, %19, %26 : vector<16x128xi1>, vector<16x128xf32>
    %28 = vector.shape_cast %27 : vector<16x128xf32> to vector<2x8x128xf32>
    %cst_9 = arith.constant dense<0.000000e+00> : vector<8x128xf32>
    %29 = vector.multi_reduction <add>, %28, %cst_9 [0] : vector<2x8x128xf32> to vector<8x128xf32>
    %c0_10 = arith.constant 0 : index
    %c0_11 = arith.constant 0 : index
    %c0_12 = arith.constant 0 : index
    %30 = vector.load %arg3[%c0_10, %c0_11, %c0_12] : memref<1x8x128xf32, #tpu.memory_space<vmem>>, vector<1x8x128xf32>
    %31 = vector.shape_cast %30 : vector<1x8x128xf32> to vector<8x128xf32>
    %32 = vector.shape_cast %29 : vector<8x128xf32> to vector<1x8x128xf32>
    tpu.vector_store %arg3[%c0_10, %c0_11, %c0_12], %32 {strides = array<i32>} : memref<1x8x128xf32, #tpu.memory_space<vmem>>, vector<1x8x128xf32>,
    return
  }
  func.func @transform_0(%arg0: i32) -> (i32, i32) {
    %c0_i32 = arith.constant 0 : i32
    %c0_i32_0 = arith.constant 0 : i32
    return %arg0, %c0_i32 : i32, i32
  }
  func.func @transform_1(%arg0: i32) -> (i32, i32) {
    %c0_i32 = arith.constant 0 : i32
    %c0_i32_0 = arith.constant 0 : i32
    return %arg0, %c0_i32 : i32, i32
  }
  func.func @transform_2(%arg0: i32) -> (i32, i32, i32) {
    %c0_i32 = arith.constant 0 : i32
    %c0_i32_0 = arith.constant 0 : i32
    %c0_i32_1 = arith.constant 0 : i32
    return %arg0, %c0_i32, %c0_i32_0 : i32, i32, i32
  }
}

</mosaic_0001>

<llo_original>
// kernel: tpu_custom_call.1
$region0: #{tpu_custom_call.1}
  #allocation0 [shape = 'u32[]', space=smem, size = 0x4, offset = 0x4, fixed_abs, tag = 'smem constant byte address 0x4 - core index']
  #allocation1 [shape = 'u32[144,128]{1,0:T(1,128)}', space=vmem, size = 0x12000, scoped, tag = 'internal scratch']
  %s0 = inlined_call_operand.hbm [shape: f32[8,128], index: 0, kind: input, shape index: {}]
  %s1 = inlined_call_operand.hbm [shape: f32[8,128], index: 1, kind: input, shape index: {}]
  %s2 = inlined_call_operand.hbm [shape: f32[1,8,128], index: 2, kind: output, shape index: {}]
  %s3 = sld [smem:[#allocation0]]
  $region26: #{tpu_custom_call.1} parent=0
    _
  %s5 = ssub.s32 1, %s3
  %s6 = scalar_select 0, %s5, %s3
  $region1: #{tpu_custom_call.1} parent=0
    #allocation2 [shape = 'u8[8192]{0}', space=vmem, size = 0x2000, scoped, tag = 'input window, operand 0, single buffered']
    #allocation3 [shape = 's32[1]{0}', space=sflag, size = 0x4, scoped, tag = 'scoped memory for tpu_custom_call.1']
    #allocation4 [shape = 's32[1]{0}', space=sflag, size = 0x4, scoped, tag = 'scoped memory for tpu_custom_call.1']
    #allocation5 [shape = 'u8[8192]{0}', space=vmem, size = 0x2000, scoped, tag = 'input window, operand 1, single buffered']
    #allocation6 [shape = 's32[1]{0}', space=sflag, size = 0x4, scoped, tag = 'scoped memory for tpu_custom_call.1']
    #allocation7 [shape = 'u8[4096]{0}', space=vmem, size = 0x1000, scoped, tag = 'output window, operand 0, single buffered']
    %7 = vsyncpa [#allocation3], 0
    %8 = vsyncpa [#allocation6], 0
    %9 = vsyncpa [#allocation4], 0
    // Predicated region
    $region2: #{tpu_custom_call.1} parent=1 // pred_check
      _
    $region3: #{tpu_custom_call.1} parent=1 // pred_check_branch
      %11 = sbr.rel (0) target = $region5
    $region4: #{tpu_custom_call.1} parent=1 // pred_region
      %s13 = ssub.s32 256, 128
      %14 = vsyncadd [#allocation3], %s13
      %s15 = sshll.u32 [#allocation2], 4
      %s16 = int_to_ptr.vmem [resolvable:$true] %s15
      %21 = dma.hbm_to_vmem [thread:$0]  %s0, 128, %s16, [#allocation3], 128, 128, 8
    $region5: #{tpu_custom_call.1} parent=1 // pred_fallthru
      _
    // Predicated region
    $region6: #{tpu_custom_call.1} parent=1 // pred_check
      _
    $region7: #{tpu_custom_call.1} parent=1 // pred_check_branch
      %23 = sbr.rel (0) target = $region9
    $region8: #{tpu_custom_call.1} parent=1 // pred_region
      %s25 = ssub.s32 256, 128
      %26 = vsyncadd [#allocation6], %s25
      %s27 = sshll.u32 [#allocation5], 4
      %s28 = int_to_ptr.vmem [resolvable:$true] %s27
      %33 = dma.hbm_to_vmem [thread:$0]  %s1, 128, %s28, [#allocation6], 128, 128, 8
    $region9: #{tpu_custom_call.1} parent=1 // pred_fallthru
      _
    // Predicated region
    $region10: #{tpu_custom_call.1} parent=1 // pred_check
      _
    $region11: #{tpu_custom_call.1} parent=1 // pred_check_branch
      %35 = sbr.rel (0) target = $region13
    $region12: #{tpu_custom_call.1} parent=1 // pred_region
      %36 = dma.done [#allocation3], 256
    $region13: #{tpu_custom_call.1} parent=1 // pred_fallthru
      _
    // Predicated region
    $region14: #{tpu_custom_call.1} parent=1 // pred_check
      _
    $region15: #{tpu_custom_call.1} parent=1 // pred_check_branch
      %38 = sbr.rel (0) target = $region17
    $region16: #{tpu_custom_call.1} parent=1 // pred_region
      %39 = dma.done [#allocation6], 256
    $region17: #{tpu_custom_call.1} parent=1 // pred_fallthru
      _
    %v40 = vld [vmem:[#allocation2] sm:$0xff]
    %v41 = vld [vmem:[#allocation2 + $0x8] sm:$0xff]
    %v42 = vld [vmem:[#allocation5] sm:$0xff]
    %v43 = vld [vmem:[#allocation5 + $0x8] sm:$0xff]
    %v44 = vsub.f32 %v40, %v42
    %v45 = vsub.f32 %v41, %v43
    %v46 = vand.u32 2147483647, %v44
    %v47 = vand.u32 2147483647, %v45
    %v48 = vmul.f32 %v46, 0.5
    %v49 = vmul.f32 %v47, 0.5
    %v50 = vadd.f32 %v48, 0.026197849
    %v51 = vadd.f32 %v49, 0.026197849
    %v52 = vmul.f32 %v46, 19.085537
    %v53 = vmul.f32 %v47, 19.085537
    %v54 = vadd.f32 %v52, 1.0
    %v55 = vlog2.pop %v54
    %v56 = vmul.f32 %v55, 0.6931472
    %v57 = vmul.f32 -0.5, %v52
    %v58 = vadd.f32 %v57, 1.0
    %v59 = vmul.f32 %v58, %v52
    %v60 = vand.u32 2147483647, %v52
    %vm61 = vcmp.lt.f32.partialorder %v60, 0.0004427343
    %v62 = vsel %vm61, %v59, %v56
    %v63 = vadd.f32 %v53, 1.0
    %v64 = vlog2.pop %v63
    %v65 = vmul.f32 %v64, 0.6931472
    %v66 = vmul.f32 -0.5, %v53
    %v67 = vadd.f32 %v66, 1.0
    %v68 = vmul.f32 %v67, %v53
    %v69 = vand.u32 2147483647, %v53
    %vm70 = vcmp.lt.f32.partialorder %v69, 0.0004427343
    %v71 = vsel %vm70, %v68, %v65
    %v72 = vmul.f32 %v50, %v62
    %v73 = vmul.f32 %v51, %v71
    %v74 = vsub.f32 %v72, %v48
    %v75 = vsub.f32 %v73, %v49
    %v76 = vmul.f32 %v46, 1.5
    %v77 = vmul.f32 %v47, 1.5
    %v78 = vadd.f32 %v76, -0.42140645
    %v79 = vadd.f32 %v77, -0.42140645
    %vm80 = vcmp.lt.f32.partialorder %v46, 1.0
    %vm81 = vcmp.lt.f32.partialorder %v47, 1.0
    %v82 = vsel %vm80, %v74, %v78
    %v83 = vsel %vm81, %v75, %v79
    %v84 = vlaneseq
    %v85 = vshrl.u32 %v84, 7
    %v86 = vadd.s32 %v85, 8
    %s87 = smul.u32 0, 16
    %v88 = vstv %s87
    %v89 = vadd.s32 %v85, %v88
    %v90 = vadd.s32 %v86, %v88
    %vm91 = vcmp.lt.s32.totalorder %v89, 8
    %vm92 = vcmp.lt.s32.totalorder %v90, 8
    %v93 = vsel %vm91, %v82, 0.0
    %v94 = vsel %vm92, %v83, 0.0
    %v95 = vadd.f32 %v93, %v94
    %96 = vst [vmem:[#allocation7] sm:$0xff] %v95
    // Predicated region
    $region18: #{tpu_custom_call.1} parent=1 // pred_check
      _
    $region19: #{tpu_custom_call.1} parent=1 // pred_check_branch
      %98 = sbr.rel (0) target = $region21
    $region20: #{tpu_custom_call.1} parent=1 // pred_region
      %s100 = ssub.s32 128, 128
      %101 = vsyncadd [#allocation4], %s100
      %s103 = sshll.u32 [#allocation7], 4
      %s104 = int_to_ptr.vmem [resolvable:$true] %s103
      %106 = dma.vmem_to_hbm [thread:$0]  %s104, 128, %s2, [#allocation4]
    $region21: #{tpu_custom_call.1} parent=1 // pred_fallthru
      _
    // Predicated region
    $region22: #{tpu_custom_call.1} parent=1 // pred_check
      _
    $region23: #{tpu_custom_call.1} parent=1 // pred_check_branch
      %108 = sbr.rel (0) target = $region25
    $region24: #{tpu_custom_call.1} parent=1 // pred_region
      %109 = dma.done [#allocation4], 128
    $region25: #{tpu_custom_call.1} parent=1 // pred_fallthru
      _
    %110 = vsyncpa [#allocation3], 1
    %111 = vsyncpa [#allocation6], 1
    %112 = vsyncpa [#allocation4], 1

</llo_original>
